<compile_context>
chip_gen: v6e
topology: v6e:2x2x1
jax: 0.10.0
libtpu: 0.0.40
codegen_flags: <defaults>
</compile_context>

<pallas_src>
import jax
import jax.numpy as jnp
from jax.experimental import pallas as pl
from jax.experimental.pallas import tpu as pltpu


def _round_up(a, b):
    return (a + b - 1) // b * b


def _device_kind():
    try:
        return jax.devices()[0].device_kind.lower()
    except Exception:
        return ""


def _tensorcores_per_chip(kind):
    # v7x is the only current generation with 2 TensorCores per chip.
    return 2 if "v7" in kind else 1


# ----------------------------------------------------------------------------
# Kernel: three lane-dense MXU matmuls, bias + ReLU epilogue on the VPU.
# ----------------------------------------------------------------------------
def conv_regression_kernel(x_ref, w1_ref, b1_ref, w2_ref, b2_ref,
                           wd_ref, bd_ref, o_ref):
    cdt = w1_ref.dtype                            # matmul operand dtype (bf16 or f32)
    edt = b1_ref.dtype                            # epilogue dtype (bf16 on v6e/v7x)

    # conv1 as banded matmul (x already in cdt from the wrapper)
    h1 = jnp.dot(x_ref[...], w1_ref[...], preferred_element_type=jnp.float32)
    h1 = jnp.maximum(h1.astype(edt) + b1_ref[...], 0.0).astype(cdt)   # (TB, H1p)

    # conv2 as banded matmul
    h2 = jnp.dot(h1, w2_ref[...], preferred_element_type=jnp.float32)
    h2 = jnp.maximum(h2.astype(edt) + b2_ref[...], 0.0).astype(cdt)   # (TB, H2p)

    # decode (lane-padded to 128 outputs) + ReLU in f32
    y = jnp.dot(h2, wd_ref[...], preferred_element_type=jnp.float32)
    o_ref[...] = jnp.maximum(y + bd_ref[...], 0.0).astype(o_ref.dtype)


# ----------------------------------------------------------------------------
# Wrapper: build lane-padded banded weights, tile the batch, call the kernel.
# ----------------------------------------------------------------------------
def conv_regression_pallas(x, torch_w1, torch_b1, torch_w2, torch_b2,
                           torch_wd, torch_bd, *, block_b=None,
                           matmul_dtype=jnp.bfloat16, epilogue_dtype=None):
    """x: (B, D) float32.  PyTorch-convention params:
       w1 (C1, 1, K), b1 (C1,), w2 (C2, C1, K), b2 (C2,), wd (O, C2*L2), bd (O,)."""
    x = jnp.asarray(x, jnp.float32)
    B, D = x.shape
    C1, _, K = torch_w1.shape
    C2 = torch_w2.shape[0]
    O = torch_wd.shape[0]
    L1 = D - (K - 1)
    L2 = L1 - (K - 1)

    H1, H2 = L1 * C1, L2 * C2
    H1p = _round_up(H1, 128)
    H2p = _round_up(H2, 128)
    O_pad = _round_up(max(O, 128), 128)

    kind = _device_kind()
    if epilogue_dtype is None:
        # bf16 epilogue where the VPU is bf16-native; f32 on v5e / exact path.
        if jnp.dtype(matmul_dtype) == jnp.dtype(jnp.float32) or "v5" in kind:
            epilogue_dtype = jnp.float32
        else:
            epilogue_dtype = matmul_dtype

    # ---- banded conv1 weight: W1_band[d, i*C1 + c] = w1[c, 0, d - i] --------
    w1_kc = jnp.transpose(torch_w1[:, 0, :], (1, 0))                   # (K, C1)
    koff1 = jnp.arange(D)[:, None] - jnp.arange(L1)[None, :]           # (D, L1)
    valid1 = (koff1 >= 0) & (koff1 < K)
    w1_band = jnp.where(valid1[:, :, None],
                        w1_kc[jnp.clip(koff1, 0, K - 1)], 0.0)         # (D, L1, C1)
    w1_band = w1_band.reshape(D, H1)
    w1_band = jnp.pad(w1_band, ((0, 0), (0, H1p - H1)))                # (D, H1p)

    # ---- banded conv2 weight: W2_band[i*C1+c1, j*C2+c2] = w2[c2, c1, i-j] ---
    w2_kcc = jnp.transpose(torch_w2, (2, 1, 0))                        # (K, C1, C2)
    koff2 = jnp.arange(L1)[:, None] - jnp.arange(L2)[None, :]          # (L1, L2)
    valid2 = (koff2 >= 0) & (koff2 < K)
    w2_band = jnp.where(valid2[:, None, :, None],
                        jnp.transpose(w2_kcc[jnp.clip(koff2, 0, K - 1)],
                                      (0, 2, 1, 3)), 0.0)              # (L1, C1, L2, C2)
    w2_band = w2_band.reshape(H1, H2)
    w2_band = jnp.pad(w2_band, ((0, H1p - H1), (0, H2p - H2)))         # (H1p, H2p)

    # ---- decode weight: permute PyTorch flatten order (c2*L2+j) -> (j*C2+c2),
    #      zero-pad both dims to lane-dense multiples of 128 ------------------
    wd_perm = jnp.transpose(torch_wd.reshape(O, C2, L2), (2, 1, 0)).reshape(H2, O)
    wd_pad = jnp.zeros((H2p, O_pad), jnp.float32).at[:H2, :O].set(wd_perm)
    bd_pad = jnp.zeros((1, O_pad), jnp.float32).at[0, :O].set(torch_bd)

    # ---- position-replicated biases in the flattened, padded layout ---------
    b1_flat = jnp.pad(jnp.tile(torch_b1.reshape(1, C1), (1, L1)),
                      ((0, 0), (0, H1p - H1)))                         # (1, H1p)
    b2_flat = jnp.pad(jnp.tile(torch_b2.reshape(1, C2), (1, L2)),
                      ((0, 0), (0, H2p - H2)))                         # (1, H2p)

    # matmul operands (incl. x) in bf16 with f32 accumulation; final bias f32.
    x = x.astype(matmul_dtype)
    w1_band = w1_band.astype(matmul_dtype)
    w2_band = w2_band.astype(matmul_dtype)
    wd_pad = wd_pad.astype(matmul_dtype)
    b1_flat = b1_flat.astype(epilogue_dtype)
    b2_flat = b2_flat.astype(epilogue_dtype)

    # ---- batch tiling: grid=1 on single-TC chips (v5e/v6e), multiple of the
    #      core count on v7x; cap tile at 1024 rows for very large batches ----
    cores = _tensorcores_per_chip(kind)
    B8 = _round_up(B, 8)
    if block_b is None:
        TB = min(_round_up(pl.cdiv(B8, cores), 8), 1024)
    else:
        TB = min(block_b, B8)
    B_pad = _round_up(B, TB)
    if B_pad != B:
        x = jnp.pad(x, ((0, B_pad - B), (0, 0)))
    grid = (B_pad // TB,)

    flops = 2 * B_pad * (D * H1p + H1p * H2p + H2p * O_pad)
    weight_bytes = sum(int(a.size) * a.dtype.itemsize
                       for a in (w1_band, b1_flat, w2_band, b2_flat, wd_pad, bd_pad))
    bytes_accessed = (B_pad * D * jnp.dtype(matmul_dtype).itemsize
                      + 4 * B_pad * O_pad + weight_bytes)

    const = lambda i: (0, 0)
    out_pad = pl.pallas_call(
        conv_regression_kernel,
        out_shape=jax.ShapeDtypeStruct((B_pad, O_pad), jnp.float32),
        grid_spec=pltpu.PrefetchScalarGridSpec(
            num_scalar_prefetch=0,
            grid=grid,
            in_specs=[
                pl.BlockSpec((TB, D), lambda i: (i, 0)),      # x: batch-tiled
                pl.BlockSpec((D, H1p), const),                # weights / biases:
                pl.BlockSpec((1, H1p), const),                #   VMEM-resident
                pl.BlockSpec((H1p, H2p), const),              #   (constant block)
                pl.BlockSpec((1, H2p), const),
                pl.BlockSpec((H2p, O_pad), const),
                pl.BlockSpec((1, O_pad), const),
            ],
            out_specs=pl.BlockSpec((TB, O_pad), lambda i: (i, 0)),
        ),
        compiler_params=pltpu.CompilerParams(
            dimension_semantics=("parallel",)),
        cost_estimate=pl.CostEstimate(flops=flops, transcendentals=0,
                                      bytes_accessed=bytes_accessed),
    )(x, w1_band, b1_flat, w2_band, b2_flat, wd_pad, bd_pad)

    return out_pad[:B, :O]


# ----------------------------------------------------------------------------
# Pure-JAX reference mirroring the PyTorch forward exactly (NCW convs).
# ----------------------------------------------------------------------------
def conv_regression_ref(x, w1, b1, w2, b2, wd, bd):
    xr = x[:, None, :]                                                 # (B, 1, D)
    y1 = jax.lax.conv_general_dilated(
        xr, w1, (1,), 'VALID', dimension_numbers=('NCH', 'OIH', 'NCH'))
    y1 = jnp.maximum(y1 + b1[None, :, None], 0.0)
    y2 = jax.lax.conv_general_dilated(
        y1, w2, (1,), 'VALID', dimension_numbers=('NCH', 'OIH', 'NCH'))
    y2 = jnp.maximum(y2 + b2[None, :, None], 0.0)
    enc = y2.reshape(x.shape[0], -1)                                   # (B, C2*L2)
    return jnp.maximum(enc @ wd.T + bd, 0.0)


if __name__ == "__main__":
    # Module hyper-params: input_dim=16, hidden_dim=32, kernel_size=3, output_dim=8.
    B, input_dim, hidden_dim, K, output_dim = 64, 16, 32, 3, 8
    C1 = hidden_dim // 4
    encode_dim = hidden_dim * (input_dim - 2 * (K - 1))

    key = jax.random.PRNGKey(0)
    ks = jax.random.split(key, 8)
    x = jax.random.normal(ks[0], (B, input_dim), dtype=jnp.float32)
    w1 = 0.3 * jax.random.normal(ks[1], (C1, 1, K), dtype=jnp.float32)
    b1 = 0.1 * jax.random.normal(ks[2], (C1,), dtype=jnp.float32)
    w2 = 0.2 * jax.random.normal(ks[3], (hidden_dim, C1, K), dtype=jnp.float32)
    b2 = 0.1 * jax.random.normal(ks[4], (hidden_dim,), dtype=jnp.float32)
    wd = 0.05 * jax.random.normal(ks[5], (output_dim, encode_dim), dtype=jnp.float32)
    bd = 0.1 * jax.random.normal(ks[6], (output_dim,), dtype=jnp.float32)

    ref = conv_regression_ref(x, w1, b1, w2, b2, wd, bd)

    # Exact-math check: f32 MXU operands validate the banded-matmul rewrite +
    # the 128-lane zero-padding of every hidden width.
    out_f32 = jax.block_until_ready(conv_regression_pallas(
        x, w1, b1, w2, b2, wd, bd, matmul_dtype=jnp.float32))
    assert out_f32.shape == (B, output_dim)
    assert jnp.allclose(out_f32, ref, atol=2e-4, rtol=2e-4), \
        f"f32 mismatch: max abs err {jnp.max(jnp.abs(out_f32 - ref))}"

    # Fast path (default): bf16 MXU operands + (v6e/v7x) bf16 epilogue,
    # f32 accumulation -> looser tolerance.
    out_bf16 = jax.block_until_ready(conv_regression_pallas(
        x, w1, b1, w2, b2, wd, bd))
    assert out_bf16.shape == (B, output_dim)
    assert jnp.allclose(out_bf16, ref, atol=6e-2, rtol=6e-2), \
        f"bf16 mismatch: max abs err {jnp.max(jnp.abs(out_bf16 - ref))}"

    print("KERNEL_OK")
</pallas_src>

<mosaic_0001>
module attributes {stable_mosaic.version = 11 : i64} {
  func.func @conv_regression_kernel(%arg0: i32, %arg1: memref<64x16xf32, #tpu.memory_space<vmem>>, %arg2: memref<16x128xf32, #tpu.memory_space<vmem>>, %arg3: memref<1x128xf32, #tpu.memory_space<vmem>>, %arg4: memref<128x384xf32, #tpu.memory_space<vmem>>, %arg5: memref<1x384xf32, #tpu.memory_space<vmem>>, %arg6: memref<384x128xf32, #tpu.memory_space<vmem>>, %arg7: memref<1x128xf32, #tpu.memory_space<vmem>>, %arg8: memref<64x128xf32, #tpu.memory_space<vmem>>) attributes {dimension_semantics = [#tpu.dimension_semantics<parallel>], iteration_bounds = array<i64: 1>, scalar_prefetch = 0 : i64, scratch_operands = 0 : i64, tpu.core_type = #tpu.core_type<tc>, window_params = [{transform_indices = @transform_0, window_bounds = array<i64: 64, 16>}, {pipeline_mode = #tpu.pipeline_mode<synchronous>, transform_indices = @transform_1, window_bounds = array<i64: 16, 128>}, {pipeline_mode = #tpu.pipeline_mode<synchronous>, transform_indices = @transform_2, window_bounds = array<i64: 1, 128>}, {pipeline_mode = #tpu.pipeline_mode<synchronous>, transform_indices = @transform_3, window_bounds = array<i64: 128, 384>}, {pipeline_mode = #tpu.pipeline_mode<synchronous>, transform_indices = @transform_4, window_bounds = array<i64: 1, 384>}, {pipeline_mode = #tpu.pipeline_mode<synchronous>, transform_indices = @transform_5, window_bounds = array<i64: 384, 128>}, {pipeline_mode = #tpu.pipeline_mode<synchronous>, transform_indices = @transform_6, window_bounds = array<i64: 1, 128>}, {transform_indices = @transform_7, window_bounds = array<i64: 64, 128>}]} {
    %c0 = arith.constant 0 : index
    %c0_0 = arith.constant 0 : index
    %0 = vector.load %arg1[%c0, %c0_0] : memref<64x16xf32, #tpu.memory_space<vmem>>, vector<64x16xf32>
    %c0_1 = arith.constant 0 : index
    %c0_2 = arith.constant 0 : index
    %1 = vector.load %arg2[%c0_1, %c0_2] : memref<16x128xf32, #tpu.memory_space<vmem>>, vector<16x128xf32>
    %cst = arith.constant dense<0.000000e+00> : vector<64x128xf32>
    %2 = tpu.matmul %0, %1, %cst {dimension_numbers = #tpu.dot_dimension_numbers<[1], [0], [0], [1], [0, 0, 1, 1], [], []>} : vector<64x16xf32>, vector<16x128xf32>, vector<64x128xf32> -> vector<64x128xf32>
    %c0_3 = arith.constant 0 : index
    %c0_4 = arith.constant 0 : index
    %3 = vector.load %arg3[%c0_3, %c0_4] : memref<1x128xf32, #tpu.memory_space<vmem>>, vector<1x128xf32>
    %4 = vector.broadcast %3 : vector<1x128xf32> to vector<64x128xf32>
    %5 = arith.addf %2, %4 : vector<64x128xf32>
    %cst_5 = arith.constant 0.000000e+00 : f32
    %6 = vector.broadcast %cst_5 : f32 to vector<64x128xf32>
    %7 = arith.maximumf %5, %6 : vector<64x128xf32>
    %c0_6 = arith.constant 0 : index
    %c0_7 = arith.constant 0 : index
    %8 = vector.load %arg4[%c0_6, %c0_7] : memref<128x384xf32, #tpu.memory_space<vmem>>, vector<128x384xf32>
    %cst_8 = arith.constant dense<0.000000e+00> : vector<64x384xf32>
    %9 = tpu.matmul %7, %8, %cst_8 {dimension_numbers = #tpu.dot_dimension_numbers<[1], [0], [0], [1], [0, 0, 1, 1], [], []>} : vector<64x128xf32>, vector<128x384xf32>, vector<64x384xf32> -> vector<64x384xf32>
    %c0_9 = arith.constant 0 : index
    %c0_10 = arith.constant 0 : index
    %10 = vector.load %arg5[%c0_9, %c0_10] : memref<1x384xf32, #tpu.memory_space<vmem>>, vector<1x384xf32>
    %11 = vector.broadcast %10 : vector<1x384xf32> to vector<64x384xf32>
    %12 = arith.addf %9, %11 : vector<64x384xf32>
    %cst_11 = arith.constant 0.000000e+00 : f32
    %13 = vector.broadcast %cst_11 : f32 to vector<64x384xf32>
    %14 = arith.maximumf %12, %13 : vector<64x384xf32>
    %c0_12 = arith.constant 0 : index
    %c0_13 = arith.constant 0 : index
    %15 = vector.load %arg6[%c0_12, %c0_13] : memref<384x128xf32, #tpu.memory_space<vmem>>, vector<384x128xf32>
    %cst_14 = arith.constant dense<0.000000e+00> : vector<64x128xf32>
    %16 = tpu.matmul %14, %15, %cst_14 {dimension_numbers = #tpu.dot_dimension_numbers<[1], [0], [0], [1], [0, 0, 1, 1], [], []>} : vector<64x384xf32>, vector<384x128xf32>, vector<64x128xf32> -> vector<64x128xf32>
    %c0_15 = arith.constant 0 : index
    %c0_16 = arith.constant 0 : index
    %17 = vector.load %arg7[%c0_15, %c0_16] : memref<1x128xf32, #tpu.memory_space<vmem>>, vector<1x128xf32>
    %18 = vector.broadcast %17 : vector<1x128xf32> to vector<64x128xf32>
    %19 = arith.addf %16, %18 : vector<64x128xf32>
    %cst_17 = arith.constant 0.000000e+00 : f32
    %20 = vector.broadcast %cst_17 : f32 to vector<64x128xf32>
    %21 = arith.maximumf %19, %20 : vector<64x128xf32>
    %c0_18 = arith.constant 0 : index
    %c0_19 = arith.constant 0 : index
    %22 = vector.load %arg8[%c0_18, %c0_19] : memref<64x128xf32, #tpu.memory_space<vmem>>, vector<64x128xf32>
    tpu.vector_store %arg8[%c0_18, %c0_19], %21 {strides = array<i32>} : memref<64x128xf32, #tpu.memory_space<vmem>>, vector<64x128xf32>,
    return
  }
  func.func @transform_0(%arg0: i32) -> (i32, i32) {
    %c0_i32 = arith.constant 0 : i32
    %c0_i32_0 = arith.constant 0 : i32
    return %arg0, %c0_i32 : i32, i32
  }
  func.func @transform_1(%arg0: i32) -> (i32, i32) {
    %c0_i32 = arith.constant 0 : i32
    %c0_i32_0 = arith.constant 0 : i32
    %c0_i32_1 = arith.constant 0 : i32
    return %c0_i32, %c0_i32_0 : i32, i32
  }
  func.func @transform_2(%arg0: i32) -> (i32, i32) {
    %c0_i32 = arith.constant 0 : i32
    %c0_i32_0 = arith.constant 0 : i32
    %c0_i32_1 = arith.constant 0 : i32
    return %c0_i32, %c0_i32_0 : i32, i32
  }
  func.func @transform_3(%arg0: i32) -> (i32, i32) {
    %c0_i32 = arith.constant 0 : i32
    %c0_i32_0 = arith.constant 0 : i32
    %c0_i32_1 = arith.constant 0 : i32
    return %c0_i32, %c0_i32_0 : i32, i32
  }
  func.func @transform_4(%arg0: i32) -> (i32, i32) {
    %c0_i32 = arith.constant 0 : i32
    %c0_i32_0 = arith.constant 0 : i32
    %c0_i32_1 = arith.constant 0 : i32
    return %c0_i32, %c0_i32_0 : i32, i32
  }
  func.func @transform_5(%arg0: i32) -> (i32, i32) {
    %c0_i32 = arith.constant 0 : i32
    %c0_i32_0 = arith.constant 0 : i32
    %c0_i32_1 = arith.constant 0 : i32
    return %c0_i32, %c0_i32_0 : i32, i32
  }
  func.func @transform_6(%arg0: i32) -> (i32, i32) {
    %c0_i32 = arith.constant 0 : i32
    %c0_i32_0 = arith.constant 0 : i32
    %c0_i32_1 = arith.constant 0 : i32
    return %c0_i32, %c0_i32_0 : i32, i32
  }
  func.func @transform_7(%arg0: i32) -> (i32, i32) {
    %c0_i32 = arith.constant 0 : i32
    %c0_i32_0 = arith.constant 0 : i32
    return %arg0, %c0_i32 : i32, i32
  }
}

</mosaic_0001>

<llo_original>
// kernel: tpu_custom_call.1
$region0: #{tpu_custom_call.1}
  #allocation0 [shape = 'u32[]', space=smem, size = 0x4, offset = 0x4, fixed_abs, tag = 'smem constant byte address 0x4 - core index']
  #allocation1 [shape = 'u32[144,128]{1,0:T(1,128)}', space=vmem, size = 0x12000, scoped, tag = 'internal scratch']
  %s0 = inlined_call_operand.vmem [shape: f32[64,16], index: 0, kind: input, shape index: {}]
  %s1 = inlined_call_operand.vmem [shape: f32[16,128], index: 1, kind: input, shape index: {}]
  %s2 = inlined_call_operand.vmem [shape: f32[1,128], index: 2, kind: input, shape index: {}]
  %s3 = inlined_call_operand.hbm [shape: f32[128,384], index: 3, kind: input, shape index: {}]
  %s4 = inlined_call_operand.vmem [shape: f32[1,384], index: 4, kind: input, shape index: {}]
  %s5 = inlined_call_operand.hbm [shape: f32[384,128], index: 5, kind: input, shape index: {}]
  %s6 = inlined_call_operand.vmem [shape: f32[1,128], index: 6, kind: input, shape index: {}]
  %s7 = inlined_call_operand.hbm [shape: f32[64,128], index: 7, kind: output, shape index: {}]
  %s8 = sld [smem:[#allocation0]]
  $region46: #{tpu_custom_call.1} parent=0
    _
  %s10 = ssub.s32 1, %s8
  %s11 = scalar_select 0, %s10, %s8
  $region1: #{tpu_custom_call.1} parent=0
    #allocation2 [shape = 'u8[196608]{0}', space=vmem, size = 0x30000, scoped, tag = 'input window, operand 3, single buffered']
    #allocation3 [shape = 's32[1]{0}', space=sflag, size = 0x4, scoped, tag = 'scoped memory for tpu_custom_call.1']
    #allocation4 [shape = 's32[1]{0}', space=sflag, size = 0x4, scoped, tag = 'scoped memory for tpu_custom_call.1']
    #allocation5 [shape = 'u8[196608]{0}', space=vmem, size = 0x30000, scoped, tag = 'input window, operand 5, single buffered']
    #allocation6 [shape = 's32[1]{0}', space=sflag, size = 0x4, scoped, tag = 'scoped memory for tpu_custom_call.1']
    #allocation7 [shape = 'u8[32768]{0}', space=vmem, size = 0x8000, scoped, tag = 'output window, operand 0, single buffered']
    %12 = vsyncpa [#allocation3], 0
    %13 = vsyncpa [#allocation6], 0
    %14 = vsyncpa [#allocation4], 0
    // Predicated region
    $region2: #{tpu_custom_call.1} parent=1 // pred_check
      _
    $region3: #{tpu_custom_call.1} parent=1 // pred_check_branch
      %16 = sbr.rel (0) target = $region5
    $region4: #{tpu_custom_call.1} parent=1 // pred_region
      _
    $region5: #{tpu_custom_call.1} parent=1 // pred_fallthru
      _
    // Predicated region
    $region6: #{tpu_custom_call.1} parent=1 // pred_check
      _
    $region7: #{tpu_custom_call.1} parent=1 // pred_check_branch
      %18 = sbr.rel (0) target = $region9
    $region8: #{tpu_custom_call.1} parent=1 // pred_region
      _
    $region9: #{tpu_custom_call.1} parent=1 // pred_fallthru
      _
    // Predicated region
    $region10: #{tpu_custom_call.1} parent=1 // pred_check
      _
    $region11: #{tpu_custom_call.1} parent=1 // pred_check_branch
      %20 = sbr.rel (0) target = $region13
    $region12: #{tpu_custom_call.1} parent=1 // pred_region
      _
    $region13: #{tpu_custom_call.1} parent=1 // pred_fallthru
      _
    // Predicated region
    $region14: #{tpu_custom_call.1} parent=1 // pred_check
      _
    $region15: #{tpu_custom_call.1} parent=1 // pred_check_branch
      %22 = sbr.rel (0) target = $region17
    $region16: #{tpu_custom_call.1} parent=1 // pred_region
      %s24 = ssub.s32 6144, 6144
      %25 = vsyncadd [#allocation3], %s24
      %s26 = sshll.u32 [#allocation2], 4
      %s27 = int_to_ptr.vmem [resolvable:$true] %s26
      %32 = dma.hbm_to_vmem [thread:$0]  %s3, 6144, %s27, [#allocation3], 384, 384, 24
    $region17: #{tpu_custom_call.1} parent=1 // pred_fallthru
      _
    // Predicated region
    $region18: #{tpu_custom_call.1} parent=1 // pred_check
      _
    $region19: #{tpu_custom_call.1} parent=1 // pred_check_branch
      %34 = sbr.rel (0) target = $region21
    $region20: #{tpu_custom_call.1} parent=1 // pred_region
      _
    $region21: #{tpu_custom_call.1} parent=1 // pred_fallthru
      _
    // Predicated region
    $region22: #{tpu_custom_call.1} parent=1 // pred_check
      _
    $region23: #{tpu_custom_call.1} parent=1 // pred_check_branch
      %36 = sbr.rel (0) target = $region25
    $region24: #{tpu_custom_call.1} parent=1 // pred_region
      %s38 = ssub.s32 6144, 6144
      %39 = vsyncadd [#allocation6], %s38
      %s40 = sshll.u32 [#allocation5], 4
      %s41 = int_to_ptr.vmem [resolvable:$true] %s40
      %46 = dma.hbm_to_vmem [thread:$0]  %s5, 6144, %s41, [#allocation6], 128, 128, 8
    $region25: #{tpu_custom_call.1} parent=1 // pred_fallthru
      _
    // Predicated region
    $region26: #{tpu_custom_call.1} parent=1 // pred_check
      _
    $region27: #{tpu_custom_call.1} parent=1 // pred_check_branch
      %48 = sbr.rel (0) target = $region29
    $region28: #{tpu_custom_call.1} parent=1 // pred_region
      _
    $region29: #{tpu_custom_call.1} parent=1 // pred_fallthru
      _
    // Predicated region
    $region30: #{tpu_custom_call.1} parent=1 // pred_check
      _
    $region31: #{tpu_custom_call.1} parent=1 // pred_check_branch
      %50 = sbr.rel (0) target = $region33
    $region32: #{tpu_custom_call.1} parent=1 // pred_region
      %51 = dma.done [#allocation3], 6144
    $region33: #{tpu_custom_call.1} parent=1 // pred_fallthru
      _
    // Predicated region
    $region34: #{tpu_custom_call.1} parent=1 // pred_check
      _
    $region35: #{tpu_custom_call.1} parent=1 // pred_check_branch
      %53 = sbr.rel (0) target = $region37
    $region36: #{tpu_custom_call.1} parent=1 // pred_region
      %54 = dma.done [#allocation6], 6144
    $region37: #{tpu_custom_call.1} parent=1 // pred_fallthru
      _
    %v55 = vld [vmem:[%s0] sm:$0xff]
    %v56 = vld [vmem:[%s0 + $0x8] sm:$0xff]
    %v57 = vld [vmem:[%s0 + $0x10] sm:$0xff]
    %v58 = vld [vmem:[%s0 + $0x18] sm:$0xff]
    %v59 = vld [vmem:[%s0 + $0x20] sm:$0xff]
    %v60 = vld [vmem:[%s0 + $0x28] sm:$0xff]
    %v61 = vld [vmem:[%s0 + $0x30] sm:$0xff]
    %v62 = vld [vmem:[%s0 + $0x38] sm:$0xff]
    %v63 = vld [vmem:[%s1] sm:$0xff]
    %v64 = vld [vmem:[%s1 + $0x8] sm:$0xff]
    %v65 = vld [vmem:[%s2] sm:$0x1]
    %v67 = vlaneseq
    %v68 = vshrl.u32 %v67, 7
    %v69 = vsub.s32 0, %v68
    %v70 = vrot.slane %v65, %v69
    %vm72 = vcmask 130048
    %v74 = vsel %vm72, %v55, 0
    %v77 = vsel %vm72, %v56, 0
    %v80 = vsel %vm72, %v57, 0
    %v83 = vsel %vm72, %v58, 0
    %v86 = vsel %vm72, %v59, 0
    %v89 = vsel %vm72, %v60, 0
    %v92 = vsel %vm72, %v61, 0
    %v95 = vsel %vm72, %v62, 0
    %97 = vmatprep.subr.mxu0 0.0
    %98 = vmatpush1.msra.mxu0 0.0
    %99 = vmatprep.subr.mxu0 0.0
    %100 = vmatpush1.msra.mxu0 0.0
    %101 = vmatprep.subr.mxu0 0.0
    %102 = vmatpush1.msra.mxu0 0.0
    %103 = vmatprep.subr.mxu0 0.0
    %104 = vmatpush1.msra.mxu0 0.0
    %105 = vmatprep.subr.mxu0 0.0
    %106 = vmatpush1.msra.mxu0 0.0
    %107 = vmatprep.subr.mxu0 0.0
    %108 = vmatpush1.msra.mxu0 0.0
    %109 = vmatprep.subr.mxu0 0.0
    %110 = vmatpush1.msra.mxu0 0.0
    %111 = vmatprep.subr.mxu0 0.0
    %112 = vmatpush1.msra.mxu0 0.0
    %113 = vmatprep.subr.mxu0 0.0
    %114 = vmatpush1.msra.mxu0 0.0
    %115 = vmatprep.subr.mxu0 0.0
    %116 = vmatpush1.msra.mxu0 0.0
    %117 = vmatprep.subr.mxu0 0.0
    %118 = vmatpush1.msra.mxu0 0.0
    %119 = vmatprep.subr.mxu0 0.0
    %120 = vmatpush1.msra.mxu0 0.0
    %121 = vmatprep.subr.mxu0 0.0
    %122 = vmatpush1.msra.mxu0 0.0
    %123 = vmatprep.subr.mxu0 0.0
    %124 = vmatpush1.msra.mxu0 0.0
    %125 = vmatprep.subr.mxu0 0.0
    %126 = vmatpush1.msra.mxu0 %v64
    %127 = vmatprep.subr.mxu0 0.0
    %128 = vmatpush1.msra.mxu0 %v63
    %129 = vmatprep.subr.mxu0 0.0
    %130 = vmatpush2.msra.mxu0 0.0
    %131 = vmatprep.subr.mxu0 0.0
    %132 = vmatpush2.msra.mxu0 0.0
    %133 = vmatprep.subr.mxu0 0.0
    %134 = vmatpush2.msra.mxu0 0.0
    %135 = vmatprep.subr.mxu0 0.0
    %136 = vmatpush2.msra.mxu0 0.0
    %137 = vmatprep.subr.mxu0 0.0
    %138 = vmatpush2.msra.mxu0 0.0
    %139 = vmatprep.subr.mxu0 0.0
    %140 = vmatpush2.msra.mxu0 0.0
    %141 = vmatprep.subr.mxu0 0.0
    %142 = vmatpush2.msra.mxu0 0.0
    %143 = vmatprep.subr.mxu0 0.0
    %144 = vmatpush2.msra.mxu0 0.0
    %145 = vmatprep.subr.mxu0 0.0
    %146 = vmatpush2.msra.mxu0 0.0
    %147 = vmatprep.subr.mxu0 0.0
    %148 = vmatpush2.msra.mxu0 0.0
    %149 = vmatprep.subr.mxu0 0.0
    %150 = vmatpush2.msra.mxu0 0.0
    %151 = vmatprep.subr.mxu0 0.0
    %152 = vmatpush2.msra.mxu0 0.0
    %153 = vmatprep.subr.mxu0 0.0
    %154 = vmatpush2.msra.mxu0 0.0
    %155 = vmatprep.subr.mxu0 0.0
    %156 = vmatpush2.msra.mxu0 0.0
    %157 = vmatprep.subr.mxu0 0.0
    %158 = vmatpush2.msra.mxu0 0.0
    %159 = vmatprep.subr.mxu0 0.0
    %160 = vmatpush2.msra.mxu0 0.0
    %161 = vmatprep.mubr.f32.mxu0 0.0
    %162 = vmatmul.mubr.f32.gmra.mxu0 %v74
    %v163 = vpop.f32.mrf.mxu0
    %v164 = vadd.f32 %v70, %v163
    %v165 = vpop.f32.mrf.mxu0
    %166 = vmatprep.mubr.f32.mxu0 0.0
    %167 = vmatmul.mubr.f32.gmra.mxu0 %v77
    %v168 = vpop.f32.mrf.mxu0
    %v169 = vadd.f32 %v70, %v168
    %v170 = vpop.f32.mrf.mxu0
    %171 = vmatprep.mubr.f32.mxu0 0.0
    %172 = vmatmul.mubr.f32.gmra.mxu0 %v80
    %v173 = vpop.f32.mrf.mxu0
    %v174 = vadd.f32 %v70, %v173
    %v175 = vpop.f32.mrf.mxu0
    %176 = vmatprep.mubr.f32.mxu0 0.0
    %177 = vmatmul.mubr.f32.gmra.mxu0 %v83
    %v178 = vpop.f32.mrf.mxu0
    %v179 = vadd.f32 %v70, %v178
    %v180 = vpop.f32.mrf.mxu0
    %181 = vmatprep.mubr.f32.mxu0 0.0
    %182 = vmatmul.mubr.f32.gmra.mxu0 %v86
    %v183 = vpop.f32.mrf.mxu0
    %v184 = vadd.f32 %v70, %v183
    %v185 = vpop.f32.mrf.mxu0
    %186 = vmatprep.mubr.f32.mxu0 0.0
    %187 = vmatmul.mubr.f32.gmra.mxu0 %v89
    %v188 = vpop.f32.mrf.mxu0
    %v189 = vadd.f32 %v70, %v188
    %v190 = vpop.f32.mrf.mxu0
    %191 = vmatprep.mubr.f32.mxu0 0.0
    %192 = vmatmul.mubr.f32.gmra.mxu0 %v92
    %v193 = vpop.f32.mrf.mxu0
    %v194 = vadd.f32 %v70, %v193
    %v195 = vpop.f32.mrf.mxu0
    %196 = vmatprep.mubr.f32.mxu0 0.0
    %197 = vmatmul.mubr.f32.gmra.mxu0 %v95
    %v198 = vpop.f32.mrf.mxu0
    %v199 = vadd.f32 %v70, %v198
    %v200 = vpop.f32.mrf.mxu0
    %201 = vdwg.mxu0
    %v202 = vmax.f32 %v164, 0.0
    %v203 = vmax.f32 %v169, 0.0
    %v204 = vmax.f32 %v174, 0.0
    %v205 = vmax.f32 %v179, 0.0
    %v206 = vmax.f32 %v184, 0.0
    %v207 = vmax.f32 %v189, 0.0
    %v208 = vmax.f32 %v194, 0.0
    %v209 = vmax.f32 %v199, 0.0
    %v210 = vld [vmem:[#allocation2] sm:$0xff]
    %v211 = vld [vmem:[#allocation2 + $0x8] sm:$0xff]
    %v212 = vld [vmem:[#allocation2 + $0x10] sm:$0xff]
    %v213 = vld [vmem:[#allocation2 + $0x18] sm:$0xff]
    %v214 = vld [vmem:[#allocation2 + $0x20] sm:$0xff]
    %v215 = vld [vmem:[#allocation2 + $0x28] sm:$0xff]
    %v216 = vld [vmem:[#allocation2 + $0x30] sm:$0xff]
    %v217 = vld [vmem:[#allocation2 + $0x38] sm:$0xff]
    %v218 = vld [vmem:[#allocation2 + $0x40] sm:$0xff]
    %v219 = vld [vmem:[#allocation2 + $0x48] sm:$0xff]
    %v220 = vld [vmem:[#allocation2 + $0x50] sm:$0xff]
    %v221 = vld [vmem:[#allocation2 + $0x58] sm:$0xff]
    %v222 = vld [vmem:[#allocation2 + $0x60] sm:$0xff]
    %v223 = vld [vmem:[#allocation2 + $0x68] sm:$0xff]
    %v224 = vld [vmem:[#allocation2 + $0x70] sm:$0xff]
    %v225 = vld [vmem:[#allocation2 + $0x78] sm:$0xff]
    %v226 = vld [vmem:[#allocation2 + $0x80] sm:$0xff]
    %v227 = vld [vmem:[#allocation2 + $0x88] sm:$0xff]
    %v228 = vld [vmem:[#allocation2 + $0x90] sm:$0xff]
    %v229 = vld [vmem:[#allocation2 + $0x98] sm:$0xff]
    %v230 = vld [vmem:[#allocation2 + $0xa0] sm:$0xff]
    %v231 = vld [vmem:[#allocation2 + $0xa8] sm:$0xff]
    %v232 = vld [vmem:[#allocation2 + $0xb0] sm:$0xff]
    %v233 = vld [vmem:[#allocation2 + $0xb8] sm:$0xff]
    %v234 = vld [vmem:[#allocation2 + $0xc0] sm:$0xff]
    %v235 = vld [vmem:[#allocation2 + $0xc8] sm:$0xff]
    %v236 = vld [vmem:[#allocation2 + $0xd0] sm:$0xff]
    %v237 = vld [vmem:[#allocation2 + $0xd8] sm:$0xff]
    %v238 = vld [vmem:[#allocation2 + $0xe0] sm:$0xff]
    %v239 = vld [vmem:[#allocation2 + $0xe8] sm:$0xff]
    %v240 = vld [vmem:[#allocation2 + $0xf0] sm:$0xff]
    %v241 = vld [vmem:[#allocation2 + $0xf8] sm:$0xff]
    %v242 = vld [vmem:[#allocation2 + $0x100] sm:$0xff]
    %v243 = vld [vmem:[#allocation2 + $0x108] sm:$0xff]
    %v244 = vld [vmem:[#allocation2 + $0x110] sm:$0xff]
    %v245 = vld [vmem:[#allocation2 + $0x118] sm:$0xff]
    %v246 = vld [vmem:[#allocation2 + $0x120] sm:$0xff]
    %v247 = vld [vmem:[#allocation2 + $0x128] sm:$0xff]
    %v248 = vld [vmem:[#allocation2 + $0x130] sm:$0xff]
    %v249 = vld [vmem:[#allocation2 + $0x138] sm:$0xff]
    %v250 = vld [vmem:[#allocation2 + $0x140] sm:$0xff]
    %v251 = vld [vmem:[#allocation2 + $0x148] sm:$0xff]
    %v252 = vld [vmem:[#allocation2 + $0x150] sm:$0xff]
    %v253 = vld [vmem:[#allocation2 + $0x158] sm:$0xff]
    %v254 = vld [vmem:[#allocation2 + $0x160] sm:$0xff]
    %v255 = vld [vmem:[#allocation2 + $0x168] sm:$0xff]
    %v256 = vld [vmem:[#allocation2 + $0x170] sm:$0xff]
    %v257 = vld [vmem:[#allocation2 + $0x178] sm:$0xff]
    %v258 = vld [vmem:[%s4] sm:$0x7]
    %v260 = vlaneseq
    %v261 = vshrl.u32 %v260, 7
    %v262 = vsub.s32 0, %v261
    %v263 = vrot.slane %v258, %v262
    %v264 = vlaneseq
    %v265 = vshrl.u32 %v264, 7
    %v266 = vsub.s32 1, %v265
    %v267 = vrot.slane %v258, %v266
    %v268 = vlaneseq
    %v269 = vshrl.u32 %v268, 7
    %v270 = vsub.s32 2, %v269
    %v271 = vrot.slane %v258, %v270
    %275 = vmatprep.subr.mxu0 %v256
    %276 = vmatpush1.msra.mxu0 %v255
    %277 = vmatprep.subr.mxu0 %v253
    %278 = vmatpush1.msra.mxu0 %v252
    %279 = vmatprep.subr.mxu0 %v250
    %280 = vmatpush1.msra.mxu0 %v249
    %281 = vmatprep.subr.mxu0 %v247
    %282 = vmatpush1.msra.mxu0 %v246
    %283 = vmatprep.subr.mxu0 %v244
    %284 = vmatpush1.msra.mxu0 %v243
    %285 = vmatprep.subr.mxu0 %v241
    %286 = vmatpush1.msra.mxu0 %v240
    %287 = vmatprep.subr.mxu0 %v238
    %288 = vmatpush1.msra.mxu0 %v237
    %289 = vmatprep.subr.mxu0 %v235
    %290 = vmatpush1.msra.mxu0 %v234
    %291 = vmatprep.subr.mxu0 %v232
    %292 = vmatpush1.msra.mxu0 %v231
    %293 = vmatprep.subr.mxu0 %v229
    %294 = vmatpush1.msra.mxu0 %v228
    %295 = vmatprep.subr.mxu0 %v226
    %296 = vmatpush1.msra.mxu0 %v225
    %297 = vmatprep.subr.mxu0 %v223
    %298 = vmatpush1.msra.mxu0 %v222
    %299 = vmatprep.subr.mxu0 %v220
    %300 = vmatpush1.msra.mxu0 %v219
    %301 = vmatprep.subr.mxu0 %v217
    %302 = vmatpush1.msra.mxu0 %v216
    %303 = vmatprep.subr.mxu0 %v214
    %304 = vmatpush1.msra.mxu0 %v213
    %305 = vmatprep.subr.mxu0 %v211
    %306 = vmatpush1.msra.mxu0 %v210
    %307 = vmatprep.subr.mxu0 0.0
    %308 = vmatpush2.msra.mxu0 0.0
    %309 = vmatprep.subr.mxu0 0.0
    %310 = vmatpush2.msra.mxu0 0.0
    %311 = vmatprep.subr.mxu0 0.0
    %312 = vmatpush2.msra.mxu0 0.0
    %313 = vmatprep.subr.mxu0 0.0
    %314 = vmatpush2.msra.mxu0 0.0
    %315 = vmatprep.subr.mxu0 0.0
    %316 = vmatpush2.msra.mxu0 0.0
    %317 = vmatprep.subr.mxu0 0.0
    %318 = vmatpush2.msra.mxu0 0.0
    %319 = vmatprep.subr.mxu0 0.0
    %320 = vmatpush2.msra.mxu0 0.0
    %321 = vmatprep.subr.mxu0 0.0
    %322 = vmatpush2.msra.mxu0 0.0
    %323 = vmatprep.subr.mxu0 0.0
    %324 = vmatpush2.msra.mxu0 0.0
    %325 = vmatprep.subr.mxu0 0.0
    %326 = vmatpush2.msra.mxu0 0.0
    %327 = vmatprep.subr.mxu0 0.0
    %328 = vmatpush2.msra.mxu0 0.0
    %329 = vmatprep.subr.mxu0 0.0
    %330 = vmatpush2.msra.mxu0 0.0
    %331 = vmatprep.subr.mxu0 0.0
    %332 = vmatpush2.msra.mxu0 0.0
    %333 = vmatprep.subr.mxu0 0.0
    %334 = vmatpush2.msra.mxu0 0.0
    %335 = vmatprep.subr.mxu0 0.0
    %336 = vmatpush2.msra.mxu0 0.0
    %337 = vmatprep.subr.mxu0 0.0
    %338 = vmatpush2.msra.mxu0 0.0
    %339 = vmatprep.mubr.f32.mxu0 0.0
    %340 = vmatmul.mubr.f32.gmra.mxu0 %v202
    %v341 = vpop.f32.mrf.mxu0
    %v342 = vadd.f32 %v263, %v341
    %v343 = vpop.f32.mrf.mxu0
    %v344 = vadd.f32 %v267, %v343
    %345 = vmatprep.mubr.f32.mxu0 0.0
    %346 = vmatmul.mubr.f32.gmra.mxu0 %v203
    %v347 = vpop.f32.mrf.mxu0
    %v348 = vadd.f32 %v263, %v347
    %v349 = vpop.f32.mrf.mxu0
    %v350 = vadd.f32 %v267, %v349
    %351 = vmatprep.mubr.f32.mxu0 0.0
    %352 = vmatmul.mubr.f32.gmra.mxu0 %v204
    %v353 = vpop.f32.mrf.mxu0
    %v354 = vadd.f32 %v263, %v353
    %v355 = vpop.f32.mrf.mxu0
    %v356 = vadd.f32 %v267, %v355
    %357 = vmatprep.mubr.f32.mxu0 0.0
    %358 = vmatmul.mubr.f32.gmra.mxu0 %v205
    %v359 = vpop.f32.mrf.mxu0
    %v360 = vadd.f32 %v263, %v359
    %v361 = vpop.f32.mrf.mxu0
    %v362 = vadd.f32 %v267, %v361
    %363 = vmatprep.mubr.f32.mxu0 0.0
    %364 = vmatmul.mubr.f32.gmra.mxu0 %v206
    %v365 = vpop.f32.mrf.mxu0
    %v366 = vadd.f32 %v263, %v365
    %v367 = vpop.f32.mrf.mxu0
    %v368 = vadd.f32 %v267, %v367
    %369 = vmatprep.mubr.f32.mxu0 0.0
    %370 = vmatmul.mubr.f32.gmra.mxu0 %v207
    %v371 = vpop.f32.mrf.mxu0
    %v372 = vadd.f32 %v263, %v371
    %v373 = vpop.f32.mrf.mxu0
    %v374 = vadd.f32 %v267, %v373
    %375 = vmatprep.mubr.f32.mxu0 0.0
    %376 = vmatmul.mubr.f32.gmra.mxu0 %v208
    %v377 = vpop.f32.mrf.mxu0
    %v378 = vadd.f32 %v263, %v377
    %v379 = vpop.f32.mrf.mxu0
    %v380 = vadd.f32 %v267, %v379
    %381 = vmatprep.mubr.f32.mxu0 0.0
    %382 = vmatmul.mubr.f32.gmra.mxu0 %v209
    %v383 = vpop.f32.mrf.mxu0
    %v384 = vadd.f32 %v263, %v383
    %v385 = vpop.f32.mrf.mxu0
    %v386 = vadd.f32 %v267, %v385
    %387 = vdwg.mxu0
    %388 = vmatprep.subr.mxu0 0.0
    %389 = vmatpush1.msra.mxu0 %v257
    %390 = vmatprep.subr.mxu0 0.0
    %391 = vmatpush1.msra.mxu0 %v254
    %392 = vmatprep.subr.mxu0 0.0
    %393 = vmatpush1.msra.mxu0 %v251
    %394 = vmatprep.subr.mxu0 0.0
    %395 = vmatpush1.msra.mxu0 %v248
    %396 = vmatprep.subr.mxu0 0.0
    %397 = vmatpush1.msra.mxu0 %v245
    %398 = vmatprep.subr.mxu0 0.0
    %399 = vmatpush1.msra.mxu0 %v242
    %400 = vmatprep.subr.mxu0 0.0
    %401 = vmatpush1.msra.mxu0 %v239
    %402 = vmatprep.subr.mxu0 0.0
    %403 = vmatpush1.msra.mxu0 %v236
    %404 = vmatprep.subr.mxu0 0.0
    %405 = vmatpush1.msra.mxu0 %v233
    %406 = vmatprep.subr.mxu0 0.0
    %407 = vmatpush1.msra.mxu0 %v230
    %408 = vmatprep.subr.mxu0 0.0
    %409 = vmatpush1.msra.mxu0 %v227
    %410 = vmatprep.subr.mxu0 0.0
    %411 = vmatpush1.msra.mxu0 %v224
    %412 = vmatprep.subr.mxu0 0.0
    %413 = vmatpush1.msra.mxu0 %v221
    %414 = vmatprep.subr.mxu0 0.0
    %415 = vmatpush1.msra.mxu0 %v218
    %416 = vmatprep.subr.mxu0 0.0
    %417 = vmatpush1.msra.mxu0 %v215
    %418 = vmatprep.subr.mxu0 0.0
    %419 = vmatpush1.msra.mxu0 %v212
    %420 = vmatprep.subr.mxu0 0.0
    %421 = vmatpush2.msra.mxu0 0.0
    %422 = vmatprep.subr.mxu0 0.0
    %423 = vmatpush2.msra.mxu0 0.0
    %424 = vmatprep.subr.mxu0 0.0
    %425 = vmatpush2.msra.mxu0 0.0
    %426 = vmatprep.subr.mxu0 0.0
    %427 = vmatpush2.msra.mxu0 0.0
    %428 = vmatprep.subr.mxu0 0.0
    %429 = vmatpush2.msra.mxu0 0.0
    %430 = vmatprep.subr.mxu0 0.0
    %431 = vmatpush2.msra.mxu0 0.0
    %432 = vmatprep.subr.mxu0 0.0
    %433 = vmatpush2.msra.mxu0 0.0
    %434 = vmatprep.subr.mxu0 0.0
    %435 = vmatpush2.msra.mxu0 0.0
    %436 = vmatprep.subr.mxu0 0.0
    %437 = vmatpush2.msra.mxu0 0.0
    %438 = vmatprep.subr.mxu0 0.0
    %439 = vmatpush2.msra.mxu0 0.0
    %440 = vmatprep.subr.mxu0 0.0
    %441 = vmatpush2.msra.mxu0 0.0
    %442 = vmatprep.subr.mxu0 0.0
    %443 = vmatpush2.msra.mxu0 0.0
    %444 = vmatprep.subr.mxu0 0.0
    %445 = vmatpush2.msra.mxu0 0.0
    %446 = vmatprep.subr.mxu0 0.0
    %447 = vmatpush2.msra.mxu0 0.0
    %448 = vmatprep.subr.mxu0 0.0
    %449 = vmatpush2.msra.mxu0 0.0
    %450 = vmatprep.subr.mxu0 0.0
    %451 = vmatpush2.msra.mxu0 0.0
    %452 = vmatprep.mubr.f32.mxu0 0.0
    %453 = vmatmul.mubr.f32.gmra.mxu0 %v202
    %v454 = vpop.f32.mrf.mxu0
    %v455 = vadd.f32 %v271, %v454
    %v456 = vpop.f32.mrf.mxu0
    %457 = vmatprep.mubr.f32.mxu0 0.0
    %458 = vmatmul.mubr.f32.gmra.mxu0 %v203
    %v459 = vpop.f32.mrf.mxu0
    %v460 = vadd.f32 %v271, %v459
    %v461 = vpop.f32.mrf.mxu0
    %462 = vmatprep.mubr.f32.mxu0 0.0
    %463 = vmatmul.mubr.f32.gmra.mxu0 %v204
    %v464 = vpop.f32.mrf.mxu0
    %v465 = vadd.f32 %v271, %v464
    %v466 = vpop.f32.mrf.mxu0
    %467 = vmatprep.mubr.f32.mxu0 0.0
    %468 = vmatmul.mubr.f32.gmra.mxu0 %v205
    %v469 = vpop.f32.mrf.mxu0
    %v470 = vadd.f32 %v271, %v469
    %v471 = vpop.f32.mrf.mxu0
    %472 = vmatprep.mubr.f32.mxu0 0.0
    %473 = vmatmul.mubr.f32.gmra.mxu0 %v206
    %v474 = vpop.f32.mrf.mxu0
    %v475 = vadd.f32 %v271, %v474
    %v476 = vpop.f32.mrf.mxu0
    %477 = vmatprep.mubr.f32.mxu0 0.0
    %478 = vmatmul.mubr.f32.gmra.mxu0 %v207
    %v479 = vpop.f32.mrf.mxu0
    %v480 = vadd.f32 %v271, %v479
    %v481 = vpop.f32.mrf.mxu0
    %482 = vmatprep.mubr.f32.mxu0 0.0
    %483 = vmatmul.mubr.f32.gmra.mxu0 %v208
    %v484 = vpop.f32.mrf.mxu0
    %v485 = vadd.f32 %v271, %v484
    %v486 = vpop.f32.mrf.mxu0
    %487 = vmatprep.mubr.f32.mxu0 0.0
    %488 = vmatmul.mubr.f32.gmra.mxu0 %v209
    %v489 = vpop.f32.mrf.mxu0
    %v490 = vadd.f32 %v271, %v489
    %v491 = vpop.f32.mrf.mxu0
    %492 = vdwg.mxu0
    %v493 = vmax.f32 %v342, 0.0
    %v494 = vmax.f32 %v344, 0.0
    %v495 = vmax.f32 %v455, 0.0
    %v496 = vmax.f32 %v348, 0.0
    %v497 = vmax.f32 %v350, 0.0
    %v498 = vmax.f32 %v460, 0.0
    %v499 = vmax.f32 %v354, 0.0
    %v500 = vmax.f32 %v356, 0.0
    %v501 = vmax.f32 %v465, 0.0
    %v502 = vmax.f32 %v360, 0.0
    %v503 = vmax.f32 %v362, 0.0
    %v504 = vmax.f32 %v470, 0.0
    %v505 = vmax.f32 %v366, 0.0
    %v506 = vmax.f32 %v368, 0.0
    %v507 = vmax.f32 %v475, 0.0
    %v508 = vmax.f32 %v372, 0.0
    %v509 = vmax.f32 %v374, 0.0
    %v510 = vmax.f32 %v480, 0.0
    %v511 = vmax.f32 %v378, 0.0
    %v512 = vmax.f32 %v380, 0.0
    %v513 = vmax.f32 %v485, 0.0
    %v514 = vmax.f32 %v384, 0.0
    %v515 = vmax.f32 %v386, 0.0
    %v516 = vmax.f32 %v490, 0.0
    %v517 = vld [vmem:[#allocation5] sm:$0xff]
    %v518 = vld [vmem:[#allocation5 + $0x8] sm:$0xff]
    %v519 = vld [vmem:[#allocation5 + $0x10] sm:$0xff]
    %v520 = vld [vmem:[#allocation5 + $0x18] sm:$0xff]
    %v521 = vld [vmem:[#allocation5 + $0x20] sm:$0xff]
    %v522 = vld [vmem:[#allocation5 + $0x28] sm:$0xff]
    %v523 = vld [vmem:[#allocation5 + $0x30] sm:$0xff]
    %v524 = vld [vmem:[#allocation5 + $0x38] sm:$0xff]
    %v525 = vld [vmem:[#allocation5 + $0x40] sm:$0xff]
    %v526 = vld [vmem:[#allocation5 + $0x48] sm:$0xff]
    %v527 = vld [vmem:[#allocation5 + $0x50] sm:$0xff]
    %v528 = vld [vmem:[#allocation5 + $0x58] sm:$0xff]
    %v529 = vld [vmem:[#allocation5 + $0x60] sm:$0xff]
    %v530 = vld [vmem:[#allocation5 + $0x68] sm:$0xff]
    %v531 = vld [vmem:[#allocation5 + $0x70] sm:$0xff]
    %v532 = vld [vmem:[#allocation5 + $0x78] sm:$0xff]
    %v533 = vld [vmem:[#allocation5 + $0x80] sm:$0xff]
    %v534 = vld [vmem:[#allocation5 + $0x88] sm:$0xff]
    %v535 = vld [vmem:[#allocation5 + $0x90] sm:$0xff]
    %v536 = vld [vmem:[#allocation5 + $0x98] sm:$0xff]
    %v537 = vld [vmem:[#allocation5 + $0xa0] sm:$0xff]
    %v538 = vld [vmem:[#allocation5 + $0xa8] sm:$0xff]
    %v539 = vld [vmem:[#allocation5 + $0xb0] sm:$0xff]
    %v540 = vld [vmem:[#allocation5 + $0xb8] sm:$0xff]
    %v541 = vld [vmem:[#allocation5 + $0xc0] sm:$0xff]
    %v542 = vld [vmem:[#allocation5 + $0xc8] sm:$0xff]
    %v543 = vld [vmem:[#allocation5 + $0xd0] sm:$0xff]
    %v544 = vld [vmem:[#allocation5 + $0xd8] sm:$0xff]
    %v545 = vld [vmem:[#allocation5 + $0xe0] sm:$0xff]
    %v546 = vld [vmem:[#allocation5 + $0xe8] sm:$0xff]
    %v547 = vld [vmem:[#allocation5 + $0xf0] sm:$0xff]
    %v548 = vld [vmem:[#allocation5 + $0xf8] sm:$0xff]
    %v549 = vld [vmem:[#allocation5 + $0x100] sm:$0xff]
    %v550 = vld [vmem:[#allocation5 + $0x108] sm:$0xff]
    %v551 = vld [vmem:[#allocation5 + $0x110] sm:$0xff]
    %v552 = vld [vmem:[#allocation5 + $0x118] sm:$0xff]
    %v553 = vld [vmem:[#allocation5 + $0x120] sm:$0xff]
    %v554 = vld [vmem:[#allocation5 + $0x128] sm:$0xff]
    %v555 = vld [vmem:[#allocation5 + $0x130] sm:$0xff]
    %v556 = vld [vmem:[#allocation5 + $0x138] sm:$0xff]
    %v557 = vld [vmem:[#allocation5 + $0x140] sm:$0xff]
    %v558 = vld [vmem:[#allocation5 + $0x148] sm:$0xff]
    %v559 = vld [vmem:[#allocation5 + $0x150] sm:$0xff]
    %v560 = vld [vmem:[#allocation5 + $0x158] sm:$0xff]
    %v561 = vld [vmem:[#allocation5 + $0x160] sm:$0xff]
    %v562 = vld [vmem:[#allocation5 + $0x168] sm:$0xff]
    %v563 = vld [vmem:[#allocation5 + $0x170] sm:$0xff]
    %v564 = vld [vmem:[#allocation5 + $0x178] sm:$0xff]
    %v565 = vld [vmem:[%s6] sm:$0x1]
    %v567 = vlaneseq
    %v568 = vshrl.u32 %v567, 7
    %v569 = vsub.s32 0, %v568
    %v570 = vrot.slane %v565, %v569
    %572 = vmatprep.subr.mxu0 0.0
    %573 = vmatpush1.msra.mxu0 %v532
    %574 = vmatprep.subr.mxu0 0.0
    %575 = vmatpush1.msra.mxu0 %v531
    %576 = vmatprep.subr.mxu0 0.0
    %577 = vmatpush1.msra.mxu0 %v530
    %578 = vmatprep.subr.mxu0 0.0
    %579 = vmatpush1.msra.mxu0 %v529
    %580 = vmatprep.subr.mxu0 0.0
    %581 = vmatpush1.msra.mxu0 %v528
    %582 = vmatprep.subr.mxu0 0.0
    %583 = vmatpush1.msra.mxu0 %v527
    %584 = vmatprep.subr.mxu0 0.0
    %585 = vmatpush1.msra.mxu0 %v526
    %586 = vmatprep.subr.mxu0 0.0
    %587 = vmatpush1.msra.mxu0 %v525
    %588 = vmatprep.subr.mxu0 0.0
    %589 = vmatpush1.msra.mxu0 %v524
    %590 = vmatprep.subr.mxu0 0.0
    %591 = vmatpush1.msra.mxu0 %v523
    %592 = vmatprep.subr.mxu0 0.0
    %593 = vmatpush1.msra.mxu0 %v522
    %594 = vmatprep.subr.mxu0 0.0
    %595 = vmatpush1.msra.mxu0 %v521
    %596 = vmatprep.subr.mxu0 0.0
    %597 = vmatpush1.msra.mxu0 %v520
    %598 = vmatprep.subr.mxu0 0.0
    %599 = vmatpush1.msra.mxu0 %v519
    %600 = vmatprep.subr.mxu0 0.0
    %601 = vmatpush1.msra.mxu0 %v518
    %602 = vmatprep.subr.mxu0 0.0
    %603 = vmatpush1.msra.mxu0 %v517
    %604 = vmatprep.subr.mxu0 0.0
    %605 = vmatpush2.msra.mxu0 %v548
    %606 = vmatprep.subr.mxu0 0.0
    %607 = vmatpush2.msra.mxu0 %v547
    %608 = vmatprep.subr.mxu0 0.0
    %609 = vmatpush2.msra.mxu0 %v546
    %610 = vmatprep.subr.mxu0 0.0
    %611 = vmatpush2.msra.mxu0 %v545
    %612 = vmatprep.subr.mxu0 0.0
    %613 = vmatpush2.msra.mxu0 %v544
    %614 = vmatprep.subr.mxu0 0.0
    %615 = vmatpush2.msra.mxu0 %v543
    %616 = vmatprep.subr.mxu0 0.0
    %617 = vmatpush2.msra.mxu0 %v542
    %618 = vmatprep.subr.mxu0 0.0
    %619 = vmatpush2.msra.mxu0 %v541
    %620 = vmatprep.subr.mxu0 0.0
    %621 = vmatpush2.msra.mxu0 %v540
    %622 = vmatprep.subr.mxu0 0.0
    %623 = vmatpush2.msra.mxu0 %v539
    %624 = vmatprep.subr.mxu0 0.0
    %625 = vmatpush2.msra.mxu0 %v538
    %626 = vmatprep.subr.mxu0 0.0
    %627 = vmatpush2.msra.mxu0 %v537
    %628 = vmatprep.subr.mxu0 0.0
    %629 = vmatpush2.msra.mxu0 %v536
    %630 = vmatprep.subr.mxu0 0.0
    %631 = vmatpush2.msra.mxu0 %v535
    %632 = vmatprep.subr.mxu0 0.0
    %633 = vmatpush2.msra.mxu0 %v534
    %634 = vmatprep.subr.mxu0 0.0
    %635 = vmatpush2.msra.mxu0 %v533
    %636 = vmatprep.mubr.f32.mxu0 %v494
    %637 = vmatmul.mubr.f32.gmra.mxu0 %v493
    %v638 = vpop.f32.mrf.mxu0
    %v639 = vadd.f32 %v570, %v638
    %v640 = vpop.f32.mrf.mxu0
    %641 = vmatprep.mubr.f32.mxu0 %v497
    %642 = vmatmul.mubr.f32.gmra.mxu0 %v496
    %v643 = vpop.f32.mrf.mxu0
    %v644 = vadd.f32 %v570, %v643
    %v645 = vpop.f32.mrf.mxu0
    %646 = vmatprep.mubr.f32.mxu0 %v500
    %647 = vmatmul.mubr.f32.gmra.mxu0 %v499
    %v648 = vpop.f32.mrf.mxu0
    %v649 = vadd.f32 %v570, %v648
    %v650 = vpop.f32.mrf.mxu0
    %651 = vmatprep.mubr.f32.mxu0 %v503
    %652 = vmatmul.mubr.f32.gmra.mxu0 %v502
    %v653 = vpop.f32.mrf.mxu0
    %v654 = vadd.f32 %v570, %v653
    %v655 = vpop.f32.mrf.mxu0
    %656 = vmatprep.mubr.f32.mxu0 %v506
    %657 = vmatmul.mubr.f32.gmra.mxu0 %v505
    %v658 = vpop.f32.mrf.mxu0
    %v659 = vadd.f32 %v570, %v658
    %v660 = vpop.f32.mrf.mxu0
    %661 = vmatprep.mubr.f32.mxu0 %v509
    %662 = vmatmul.mubr.f32.gmra.mxu0 %v508
    %v663 = vpop.f32.mrf.mxu0
    %v664 = vadd.f32 %v570, %v663
    %v665 = vpop.f32.mrf.mxu0
    %666 = vmatprep.mubr.f32.mxu0 %v512
    %667 = vmatmul.mubr.f32.gmra.mxu0 %v511
    %v668 = vpop.f32.mrf.mxu0
    %v669 = vadd.f32 %v570, %v668
    %v670 = vpop.f32.mrf.mxu0
    %671 = vmatprep.mubr.f32.mxu0 %v515
    %672 = vmatmul.mubr.f32.gmra.mxu0 %v514
    %v673 = vpop.f32.mrf.mxu0
    %v674 = vadd.f32 %v570, %v673
    %v675 = vpop.f32.mrf.mxu0
    %676 = vdwg.mxu0
    %677 = vmatprep.subr.mxu0 0.0
    %678 = vmatpush1.msra.mxu0 %v564
    %679 = vmatprep.subr.mxu0 0.0
    %680 = vmatpush1.msra.mxu0 %v563
    %681 = vmatprep.subr.mxu0 0.0
    %682 = vmatpush1.msra.mxu0 %v562
    %683 = vmatprep.subr.mxu0 0.0
    %684 = vmatpush1.msra.mxu0 %v561
    %685 = vmatprep.subr.mxu0 0.0
    %686 = vmatpush1.msra.mxu0 %v560
    %687 = vmatprep.subr.mxu0 0.0
    %688 = vmatpush1.msra.mxu0 %v559
    %689 = vmatprep.subr.mxu0 0.0
    %690 = vmatpush1.msra.mxu0 %v558
    %691 = vmatprep.subr.mxu0 0.0
    %692 = vmatpush1.msra.mxu0 %v557
    %693 = vmatprep.subr.mxu0 0.0
    %694 = vmatpush1.msra.mxu0 %v556
    %695 = vmatprep.subr.mxu0 0.0
    %696 = vmatpush1.msra.mxu0 %v555
    %697 = vmatprep.subr.mxu0 0.0
    %698 = vmatpush1.msra.mxu0 %v554
    %699 = vmatprep.subr.mxu0 0.0
    %700 = vmatpush1.msra.mxu0 %v553
    %701 = vmatprep.subr.mxu0 0.0
    %702 = vmatpush1.msra.mxu0 %v552
    %703 = vmatprep.subr.mxu0 0.0
    %704 = vmatpush1.msra.mxu0 %v551
    %705 = vmatprep.subr.mxu0 0.0
    %706 = vmatpush1.msra.mxu0 %v550
    %707 = vmatprep.subr.mxu0 0.0
    %708 = vmatpush1.msra.mxu0 %v549
    %709 = vmatprep.subr.mxu0 0.0
    %710 = vmatpush2.msra.mxu0 0.0
    %711 = vmatprep.subr.mxu0 0.0
    %712 = vmatpush2.msra.mxu0 0.0
    %713 = vmatprep.subr.mxu0 0.0
    %714 = vmatpush2.msra.mxu0 0.0
    %715 = vmatprep.subr.mxu0 0.0
    %716 = vmatpush2.msra.mxu0 0.0
    %717 = vmatprep.subr.mxu0 0.0
    %718 = vmatpush2.msra.mxu0 0.0
    %719 = vmatprep.subr.mxu0 0.0
    %720 = vmatpush2.msra.mxu0 0.0
    %721 = vmatprep.subr.mxu0 0.0
    %722 = vmatpush2.msra.mxu0 0.0
    %723 = vmatprep.subr.mxu0 0.0
    %724 = vmatpush2.msra.mxu0 0.0
    %725 = vmatprep.subr.mxu0 0.0
    %726 = vmatpush2.msra.mxu0 0.0
    %727 = vmatprep.subr.mxu0 0.0
    %728 = vmatpush2.msra.mxu0 0.0
    %729 = vmatprep.subr.mxu0 0.0
    %730 = vmatpush2.msra.mxu0 0.0
    %731 = vmatprep.subr.mxu0 0.0
    %732 = vmatpush2.msra.mxu0 0.0
    %733 = vmatprep.subr.mxu0 0.0
    %734 = vmatpush2.msra.mxu0 0.0
    %735 = vmatprep.subr.mxu0 0.0
    %736 = vmatpush2.msra.mxu0 0.0
    %737 = vmatprep.subr.mxu0 0.0
    %738 = vmatpush2.msra.mxu0 0.0
    %739 = vmatprep.subr.mxu0 0.0
    %740 = vmatpush2.msra.mxu0 0.0
    %741 = vmatprep.mubr.f32.mxu0 0.0
    %742 = vmatmul.mubr.f32.gmra.mxu0 %v495
    %v743 = vpop.f32.mrf.mxu0
    %v744 = vadd.f32 %v639, %v743
    %v745 = vpop.f32.mrf.mxu0
    %746 = vmatprep.mubr.f32.mxu0 0.0
    %747 = vmatmul.mubr.f32.gmra.mxu0 %v498
    %v748 = vpop.f32.mrf.mxu0
    %v749 = vadd.f32 %v644, %v748
    %v750 = vpop.f32.mrf.mxu0
    %751 = vmatprep.mubr.f32.mxu0 0.0
    %752 = vmatmul.mubr.f32.gmra.mxu0 %v501
    %v753 = vpop.f32.mrf.mxu0
    %v754 = vadd.f32 %v649, %v753
    %v755 = vpop.f32.mrf.mxu0
    %756 = vmatprep.mubr.f32.mxu0 0.0
    %757 = vmatmul.mubr.f32.gmra.mxu0 %v504
    %v758 = vpop.f32.mrf.mxu0
    %v759 = vadd.f32 %v654, %v758
    %v760 = vpop.f32.mrf.mxu0
    %761 = vmatprep.mubr.f32.mxu0 0.0
    %762 = vmatmul.mubr.f32.gmra.mxu0 %v507
    %v763 = vpop.f32.mrf.mxu0
    %v764 = vadd.f32 %v659, %v763
    %v765 = vpop.f32.mrf.mxu0
    %766 = vmatprep.mubr.f32.mxu0 0.0
    %767 = vmatmul.mubr.f32.gmra.mxu0 %v510
    %v768 = vpop.f32.mrf.mxu0
    %v769 = vadd.f32 %v664, %v768
    %v770 = vpop.f32.mrf.mxu0
    %771 = vmatprep.mubr.f32.mxu0 0.0
    %772 = vmatmul.mubr.f32.gmra.mxu0 %v513
    %v773 = vpop.f32.mrf.mxu0
    %v774 = vadd.f32 %v669, %v773
    %v775 = vpop.f32.mrf.mxu0
    %776 = vmatprep.mubr.f32.mxu0 0.0
    %777 = vmatmul.mubr.f32.gmra.mxu0 %v516
    %v778 = vpop.f32.mrf.mxu0
    %v779 = vadd.f32 %v674, %v778
    %v780 = vpop.f32.mrf.mxu0
    %781 = vdwg.mxu0
    %v782 = vmax.f32 %v744, 0.0
    %v783 = vmax.f32 %v749, 0.0
    %v784 = vmax.f32 %v754, 0.0
    %v785 = vmax.f32 %v759, 0.0
    %v786 = vmax.f32 %v764, 0.0
    %v787 = vmax.f32 %v769, 0.0
    %v788 = vmax.f32 %v774, 0.0
    %v789 = vmax.f32 %v779, 0.0
    %790 = vst [vmem:[#allocation7] sm:$0xff] %v782
    %791 = vst [vmem:[#allocation7 + $0x8] sm:$0xff] %v783
    %792 = vst [vmem:[#allocation7 + $0x10] sm:$0xff] %v784
    %793 = vst [vmem:[#allocation7 + $0x18] sm:$0xff] %v785
    %794 = vst [vmem:[#allocation7 + $0x20] sm:$0xff] %v786
    %795 = vst [vmem:[#allocation7 + $0x28] sm:$0xff] %v787
    %796 = vst [vmem:[#allocation7 + $0x30] sm:$0xff] %v788
    %797 = vst [vmem:[#allocation7 + $0x38] sm:$0xff] %v789
    // Predicated region
    $region38: #{tpu_custom_call.1} parent=1 // pred_check
      _
    $region39: #{tpu_custom_call.1} parent=1 // pred_check_branch
      %799 = sbr.rel (0) target = $region41
    $region40: #{tpu_custom_call.1} parent=1 // pred_region
      %s801 = ssub.s32 1024, 1024
      %802 = vsyncadd [#allocation4], %s801
      %s803 = sshll.u32 [#allocation7], 4
      %s804 = int_to_ptr.vmem [resolvable:$true] %s803
      %809 = dma.vmem_to_hbm [thread:$0]  %s804, 1024, %s7, [#allocation4], 128, 128, 8
    $region41: #{tpu_custom_call.1} parent=1 // pred_fallthru
      _
    // Predicated region
    $region42: #{tpu_custom_call.1} parent=1 // pred_check
      _
    $region43: #{tpu_custom_call.1} parent=1 // pred_check_branch
      %811 = sbr.rel (0) target = $region45
    $region44: #{tpu_custom_call.1} parent=1 // pred_region
      %812 = dma.done [#allocation4], 1024
    $region45: #{tpu_custom_call.1} parent=1 // pred_fallthru
      _
    %813 = vsyncpa [#allocation3], 1
    %814 = vsyncpa [#allocation6], 1
    %815 = vsyncpa [#allocation4], 1

</llo_original>
